<compile_context>
chip_gen: v5e
topology: v5e:2x2
jax: 0.10.0
libtpu: 0.0.40
codegen_flags: <defaults>
</compile_context>

<pallas_src>
import jax
import jax.numpy as jnp
from jax.experimental import pallas as pl
from jax.experimental.pallas import tpu as pltpu

_LANES = 128


def _hw_params():
    """Per-TPU-generation (block_bytes_per_buffer, vmem_limit_bytes, num_tensorcores)."""
    try:
        kind = jax.devices()[0].device_kind.lower()
    except Exception:  # pragma: no cover - defensive; fall back to conservative sizes
        kind = ""
    if "v7" in kind or "7x" in kind:
        # v7x: 64 MiB VMEM, ~3.2 TB/s HBM, 2 TCs -> big blocks, explicit limit, >=2 steps.
        return 8 << 20, 48 << 20, 2
    if "v6" in kind:
        # v6e: 128 MiB VMEM, ~1.4 TB/s HBM -> 4 MiB blocks; 4 buffers fit 32 MiB scoped.
        return 4 << 20, 32 << 20, 1
    if "v5" in kind:
        # v5e: ~0.82 TB/s HBM; 2 MiB blocks already hide the per-step overhead and stay
        # well under the 16 MiB scoped-VMEM default.
        return 2 << 20, None, 1
    # Unknown / older generation: conservative default (worked everywhere so far).
    return 2 << 20, None, 1


def _prelu_kernel(alpha_ref, x_ref, o_ref):
    # alpha_ref: (1,1) f32 scalar in SMEM; x_ref/o_ref: (block_rows, 128) tiles in VMEM.
    x = x_ref[...]
    a = alpha_ref[0, 0].astype(x.dtype)  # keep compute in the tile dtype (bf16 stays bf16)
    o_ref[...] = jnp.where(x > 0, x, a * x)


def prelu_pallas(x: jax.Array, alpha: jax.Array) -> jax.Array:
    """PReLU with a single shared alpha. x: any shape (e.g. NCHW), alpha: scalar."""
    orig_shape = x.shape
    dtype = x.dtype
    total = x.size

    itemsize = jnp.dtype(dtype).itemsize
    sublanes = max(8, 32 // itemsize)        # 8 for f32, 16 for bf16/f16

    # Flatten; pad ONLY when the flat length does not divide the lane width, and only
    # to the next multiple of 128 (raggedness in the row dim is masked by the grid).
    x_flat = x.reshape(-1)
    if total % _LANES != 0:
        padded = ((total + _LANES - 1) // _LANES) * _LANES
        x_flat = jnp.pad(x_flat, (0, padded - total))
    else:
        padded = total

    rows = padded // _LANES
    x2d = x_flat.reshape(rows, _LANES)

    block_bytes, vmem_limit, num_tc = _hw_params()

    # Large, dtype-aware block: `block_bytes` per buffer, rows a multiple of sublanes.
    target_rows = max(
        sublanes,
        (block_bytes // (_LANES * itemsize)) // sublanes * sublanes,
    )
    if num_tc > 1:
        # Guarantee >= 2 grid steps (when sublane granularity allows) so the "parallel"
        # grid axis can be sharded across both TensorCores on v7x.
        half_rows = ((pl.cdiv(rows, num_tc) + sublanes - 1) // sublanes) * sublanes
        target_rows = min(target_rows, max(sublanes, half_rows))
    block_rows = min(target_rows, rows)      # equals full dim for small inputs (valid)
    grid = (pl.cdiv(rows, block_rows),)      # partial last block is masked by Pallas

    alpha_smem = jnp.asarray(alpha, jnp.float32).reshape(1, 1)

    out2d = pl.pallas_call(
        _prelu_kernel,
        out_shape=jax.ShapeDtypeStruct((rows, _LANES), dtype),
        grid_spec=pltpu.PrefetchScalarGridSpec(
            num_scalar_prefetch=0,
            grid=grid,
            in_specs=[
                pl.BlockSpec(memory_space=pltpu.SMEM),                 # alpha (1,1)
                pl.BlockSpec((block_rows, _LANES), lambda i: (i, 0)),  # x tile
            ],
            out_specs=pl.BlockSpec((block_rows, _LANES), lambda i: (i, 0)),
        ),
        compiler_params=pltpu.CompilerParams(
            dimension_semantics=("parallel",),
            vmem_limit_bytes=vmem_limit,
        ),
        cost_estimate=pl.CostEstimate(
            flops=total,
            transcendentals=0,
            bytes_accessed=2 * total * itemsize,
        ),
    )(alpha_smem, x2d)

    out_flat = out2d.reshape(-1)
    if padded != total:
        out_flat = out_flat[:total]          # only when we actually padded
    return out_flat.reshape(orig_shape)      # dtype already matches; no astype


if __name__ == "__main__":
    key = jax.random.PRNGKey(0)
    alpha = jnp.float32(0.25)                # nn.PReLU() default init

    # 1) NCHW f32 input, lane-aligned (2*4*16*16 = 2048 = 16 rows of 128) -> no pad path.
    x = jax.random.normal(key, (2, 4, 16, 16), dtype=jnp.float32)
    y = jax.block_until_ready(prelu_pallas(x, alpha))
    y_ref = jnp.where(x > 0, x, 0.25 * x)
    assert y.shape == x.shape and y.dtype == x.dtype
    assert jnp.allclose(y, y_ref, atol=1e-6), "f32 aligned mismatch vs reference"

    # 2) Non-lane-aligned f32 input (exercises the minimal pad-to-128 + slice path).
    k2 = jax.random.fold_in(key, 1)
    x2 = jax.random.normal(k2, (3, 5, 7, 11), dtype=jnp.float32)
    y2 = jax.block_until_ready(prelu_pallas(x2, alpha))
    y2_ref = jnp.where(x2 > 0, x2, 0.25 * x2)
    assert y2.shape == x2.shape and y2.dtype == x2.dtype
    assert jnp.allclose(y2, y2_ref, atol=1e-6), "f32 unaligned mismatch vs reference"

    # 3) bf16 input (exercises dtype-aware sublanes + in-kernel alpha cast).
    k3 = jax.random.fold_in(key, 2)
    x3 = jax.random.normal(k3, (2, 4, 16, 16), dtype=jnp.bfloat16)
    y3 = jax.block_until_ready(prelu_pallas(x3, alpha))
    y3_ref = jnp.where(x3 > 0, x3, jnp.bfloat16(0.25) * x3)
    assert y3.shape == x3.shape and y3.dtype == x3.dtype
    assert jnp.allclose(y3.astype(jnp.float32), y3_ref.astype(jnp.float32),
                        atol=1e-2), "bf16 mismatch vs reference"

    print("KERNEL_OK")
</pallas_src>

<mosaic_0001>
module attributes {stable_mosaic.version = 11 : i64} {
  func.func @_prelu_kernel(%arg0: i32, %arg1: memref<1x1xf32, #tpu.memory_space<smem>>, %arg2: memref<16x128xf32, #tpu.memory_space<vmem>>, %arg3: memref<16x128xf32, #tpu.memory_space<vmem>>) attributes {dimension_semantics = [#tpu.dimension_semantics<parallel>], iteration_bounds = array<i64: 1>, scalar_prefetch = 0 : i64, scratch_operands = 0 : i64, tpu.core_type = #tpu.core_type<tc>, window_params = [{transform_indices = @transform_0, window_bounds = array<i64: 1, 1>}, {transform_indices = @transform_1, window_bounds = array<i64: 16, 128>}, {transform_indices = @transform_2, window_bounds = array<i64: 16, 128>}]} {
    %c0 = arith.constant 0 : index
    %c0_0 = arith.constant 0 : index
    %0 = vector.load %arg2[%c0, %c0_0] : memref<16x128xf32, #tpu.memory_space<vmem>>, vector<16x128xf32>
    %c0_1 = arith.constant 0 : index
    %c0_2 = arith.constant 0 : index
    %1 = memref.load %arg1[%c0_1, %c0_2] : memref<1x1xf32, #tpu.memory_space<smem>>
    %cst = arith.constant 0.000000e+00 : f32
    %2 = vector.broadcast %cst : f32 to vector<16x128xf32>
    %3 = arith.cmpf ogt, %0, %2 : vector<16x128xf32>
    %4 = vector.broadcast %1 : f32 to vector<16x128xf32>
    %5 = arith.mulf %4, %0 : vector<16x128xf32>
    %6 = arith.select %3, %0, %5 : vector<16x128xi1>, vector<16x128xf32>
    %c0_3 = arith.constant 0 : index
    %c0_4 = arith.constant 0 : index
    %7 = vector.load %arg3[%c0_3, %c0_4] : memref<16x128xf32, #tpu.memory_space<vmem>>, vector<16x128xf32>
    tpu.vector_store %arg3[%c0_3, %c0_4], %6 {strides = array<i32>} : memref<16x128xf32, #tpu.memory_space<vmem>>, vector<16x128xf32>,
    return
  }
  func.func @transform_0(%arg0: i32) -> (i32, i32) {
    %c0_i32 = arith.constant 0 : i32
    %c0_i32_0 = arith.constant 0 : i32
    %c0_i32_1 = arith.constant 0 : i32
    return %c0_i32, %c0_i32_0 : i32, i32
  }
  func.func @transform_1(%arg0: i32) -> (i32, i32) {
    %c0_i32 = arith.constant 0 : i32
    %c0_i32_0 = arith.constant 0 : i32
    return %arg0, %c0_i32 : i32, i32
  }
  func.func @transform_2(%arg0: i32) -> (i32, i32) {
    %c0_i32 = arith.constant 0 : i32
    %c0_i32_0 = arith.constant 0 : i32
    return %arg0, %c0_i32 : i32, i32
  }
}

</mosaic_0001>

<llo_original>
// kernel: tpu_custom_call.1
$region0: #{tpu_custom_call.1}
  #allocation0 [shape = 'u32[]', space=smem, size = 0x4, offset = 0x4, fixed_abs, tag = 'smem constant byte address 0x4 - core index']
  #allocation1 [shape = 'u32[72,128]{1,0:T(1,128)}', space=vmem, size = 0x9000, scoped, tag = 'internal scratch']
  #allocation2 [shape = 'f32[1,1]{1,0:T(1,128)S(6)}', space=smem, size = 0x200, scoped, tag = 'scoped memory for tpu_custom_call.1']
  %s0 = inlined_call_operand.<no memory space> [shape: f32[1,1], index: 0, kind: input, shape index: {}]
  %s1 = inlined_call_operand.hbm [shape: f32[16,128], index: 1, kind: input, shape index: {}]
  %s2 = inlined_call_operand.hbm [shape: f32[16,128], index: 2, kind: output, shape index: {}]
  %s3 = sld [smem:[#allocation0]]
  $region22: #{tpu_custom_call.1} parent=0
    _
  %s5 = ssub.s32 1, %s3
  %s6 = scalar_select 0, %s5, %s3
  %7 = sst [smem:[#allocation2]] %s0
  $region1: #{tpu_custom_call.1} parent=0
    #allocation3 [shape = 'u8[8192]{0}', space=vmem, size = 0x2000, scoped, tag = 'input window, operand 1, single buffered']
    #allocation4 [shape = 's32[1]{0}', space=sflag, size = 0x4, scoped, tag = 'scoped memory for tpu_custom_call.1']
    #allocation5 [shape = 's32[1]{0}', space=sflag, size = 0x4, scoped, tag = 'scoped memory for tpu_custom_call.1']
    #allocation6 [shape = 'u8[8192]{0}', space=vmem, size = 0x2000, scoped, tag = 'output window, operand 0, single buffered']
    %8 = vsyncpa [#allocation4], 0
    %9 = vsyncpa [#allocation5], 0
    // Predicated region
    $region2: #{tpu_custom_call.1} parent=1 // pred_check
      _
    $region3: #{tpu_custom_call.1} parent=1 // pred_check_branch
      %11 = sbr.rel (0) target = $region5
    $region4: #{tpu_custom_call.1} parent=1 // pred_region
      _
    $region5: #{tpu_custom_call.1} parent=1 // pred_fallthru
      _
    // Predicated region
    $region6: #{tpu_custom_call.1} parent=1 // pred_check
      _
    $region7: #{tpu_custom_call.1} parent=1 // pred_check_branch
      %13 = sbr.rel (0) target = $region9
    $region8: #{tpu_custom_call.1} parent=1 // pred_region
      %15 = vsyncadd [#allocation4], 0
      %s16 = sshll.u32 %s1, 4
      %s17 = int_to_ptr.hbm [resolvable:$true] %s16
      %s18 = sshll.u32 [#allocation3], 4
      %s19 = int_to_ptr.vmem [resolvable:$true] %s18
      %24 = dma.hbm_to_vmem [thread:$0]  %s17, 256, %s19, [#allocation4], 128, 128, 8
    $region9: #{tpu_custom_call.1} parent=1 // pred_fallthru
      _
    // Predicated region
    $region10: #{tpu_custom_call.1} parent=1 // pred_check
      _
    $region11: #{tpu_custom_call.1} parent=1 // pred_check_branch
      %26 = sbr.rel (0) target = $region13
    $region12: #{tpu_custom_call.1} parent=1 // pred_region
      %28 = dma.done [#allocation4], 256
    $region13: #{tpu_custom_call.1} parent=1 // pred_fallthru
      _
    %v29 = vld [vmem:[#allocation3] sm:$0xff]
    %v30 = vld [vmem:[#allocation3 + $0x8] sm:$0xff]
    %s31 = sld [smem:[#allocation2]]
    %vm32 = vcmp.gt.f32.partialorder %v29, 0.0
    %vm33 = vcmp.gt.f32.partialorder %v30, 0.0
    %v34 = vstv %s31
    %v35 = vmul.f32 %v34, %v29
    %v36 = vmul.f32 %v34, %v30
    %v37 = vsel %vm32, %v29, %v35
    %v38 = vsel %vm33, %v30, %v36
    %39 = vst [vmem:[#allocation6] sm:$0xff] %v37
    %40 = vst [vmem:[#allocation6 + $0x8] sm:$0xff] %v38
    // Predicated region
    $region14: #{tpu_custom_call.1} parent=1 // pred_check
      _
    $region15: #{tpu_custom_call.1} parent=1 // pred_check_branch
      %42 = sbr.rel (0) target = $region17
    $region16: #{tpu_custom_call.1} parent=1 // pred_region
      %44 = vsyncadd [#allocation5], 0
      %s45 = sshll.u32 [#allocation6], 4
      %s46 = int_to_ptr.vmem [resolvable:$true] %s45
      %s47 = sshll.u32 %s2, 4
      %s48 = int_to_ptr.hbm [resolvable:$true] %s47
      %53 = dma.vmem_to_hbm [thread:$0]  %s46, 256, %s48, [#allocation5], 128, 128, 8
    $region17: #{tpu_custom_call.1} parent=1 // pred_fallthru
      _
    // Predicated region
    $region18: #{tpu_custom_call.1} parent=1 // pred_check
      _
    $region19: #{tpu_custom_call.1} parent=1 // pred_check_branch
      %55 = sbr.rel (0) target = $region21
    $region20: #{tpu_custom_call.1} parent=1 // pred_region
      %57 = dma.done [#allocation5], 256
    $region21: #{tpu_custom_call.1} parent=1 // pred_fallthru
      _
    %58 = vsyncpa [#allocation4], 1
    %59 = vsyncpa [#allocation5], 1

</llo_original>
